<compile_context>
chip_gen: v6e
topology: v6e:2x2x1
jax: 0.10.0
libtpu: 0.0.40
codegen_flags: <defaults>
</compile_context>

<pallas_src>
import jax
import jax.numpy as jnp
from jax.experimental import pallas as pl
from jax.experimental.pallas import tpu as pltpu

EPS = 1e-8   # BatchNorm eps inside Dice (Dice default; see TODO above)


# --------------------------------------------------------------------------- #
# Pass 1: per-batch-row hist moments (sum_t hist, sum_t hist^2).
# --------------------------------------------------------------------------- #
def _stats_kernel(hist_ref, sum_ref, sumsq_ref):
    hist = hist_ref[...].astype(jnp.float32)           # (TB, T, E)
    sum_ref[...] = jnp.sum(hist, axis=1)               # (TB, E)
    sumsq_ref[...] = jnp.sum(hist * hist, axis=1)      # (TB, E)


# --------------------------------------------------------------------------- #
# Pass 2: BN (folded scale/shift) + Dice + Linear(4E->1) + mask + weighted sum.
# --------------------------------------------------------------------------- #
def _apply_kernel(item_ref, hist_ref, params_ref, scalars_ref, out_ref):
    TB, T, E = hist_ref.shape

    item = item_ref[...].astype(jnp.float32)[:, None, :]       # (TB, 1, E)
    hist = hist_ref[...].astype(jnp.float32)                   # (TB, T, E)

    # Lane-dense packed attention input: [item, hist, item-hist, item*hist]
    # along the feature (lane) dim -> 4E = 128 lanes.
    packed = jnp.concatenate(
        [jnp.broadcast_to(item, (TB, T, E)), hist, item - hist, item * hist],
        axis=-1)                                                # (TB, T, 4E)

    params = params_ref[...]                                    # (3, 4E) f32
    scale = params[0][None, None, :]
    shift = params[1][None, None, :]
    wvec = params[2][None, None, :]
    bias = scalars_ref[0]
    alpha = scalars_ref[1]

    # BatchNorm with global training-mode stats folded into scale/shift.
    bn = packed * scale + shift                                 # (TB, T, 4E)

    # Dice: alpha*(1-px)*x + px*x == x * (alpha + (1-alpha)*px)
    # sigmoid via a single tanh EUP push (instead of exp + divide).
    px = 0.5 * (jnp.tanh(0.5 * bn) + 1.0)
    h = packed * (alpha + (1.0 - alpha) * px)                   # (TB, T, 4E)

    # Linear(4E -> 1): one 128-lane reduction per (b, t) row, plus bias.
    # keepdims keeps T on the sublane axis (no lane<->sublane relayout).
    logits = jnp.sum(h * wvec, axis=-1, keepdims=True) + bias   # (TB, T, 1)

    # mask = (history_seq != 0).sum(-1)  -- a COUNT, as in the PyTorch code.
    mask = jnp.sum((hist != 0.0).astype(jnp.float32),
                   axis=-1, keepdims=True)                      # (TB, T, 1)
    aw = logits * mask                                          # (TB, T, 1)

    # output = sum_t aw[b, t] * history_seq[b, t, :]   (VPU + XLU, no MXU)
    out_ref[...] = jnp.sum(aw * hist, axis=1).astype(out_ref.dtype)


# --------------------------------------------------------------------------- #
# Wrapper
# --------------------------------------------------------------------------- #
def _vmem_capacity_bytes():
    try:
        return int(pltpu.get_tpu_info().vmem_capacity_bytes)
    except Exception:
        return 64 * 1024 * 1024   # conservative: v7x per-TC VMEM


def _pick_batch_tile(B, T, E, budget_bytes):
    """Batch tile so ~6 live f32 (tile, T, 4E) intermediates fit the budget."""
    per_row = T * 4 * E * 4 * 6
    cap = max(8, budget_bytes // per_row)
    cap = (cap // 8) * 8
    b_up = ((B + 7) // 8) * 8
    return max(8, min(cap, b_up))


def din_attention(item_emb, history_seq, gamma, beta, w, b, alpha, *,
                  tile_b=None, storage_dtype=None):
    """gamma/beta/w are flat (4E,) params in [item, hist, item-hist, item*hist]
    feature order; b and alpha are (1,) scalars.

    storage_dtype: optionally cast item/hist to e.g. bf16 before the kernels
    (halves HBM/DMA traffic; compute stays f32 in-kernel).  Assumes padding
    positions are exact zeros so the (!=0) mask is preserved after the cast."""
    B, T, E = history_seq.shape
    F = 4 * E

    if storage_dtype is not None:
        item_emb = item_emb.astype(storage_dtype)
        history_seq = history_seq.astype(storage_dtype)

    # Generation-aware budgets: big tiles on v5e/v6e (128 MiB VMEM),
    # conservative on v7x (64 MiB per TC, two cores double-buffering inputs).
    cap = _vmem_capacity_bytes()
    if cap >= 96 * 1024 * 1024:
        vmem_limit, tile_budget = 96 * 1024 * 1024, 24 * 1024 * 1024
    else:
        vmem_limit, tile_budget = 48 * 1024 * 1024, 10 * 1024 * 1024

    if tile_b is None:
        tile_b = _pick_batch_tile(B, T, E, tile_budget)
    if tile_b % 8 != 0:
        raise ValueError("tile_b must be a multiple of 8")

    # Pad B up to a multiple of tile_b (zero rows contribute nothing; real B is
    # used for the statistics and the padded output rows are sliced away).
    B_pad = ((B + tile_b - 1) // tile_b) * tile_b
    if B_pad != B:
        item_p = jnp.pad(item_emb, ((0, B_pad - B), (0, 0)))
        hist_p = jnp.pad(history_seq, ((0, B_pad - B), (0, 0), (0, 0)))
    else:
        item_p, hist_p = item_emb, history_seq
    nb = B_pad // tile_b

    # ---- pass 1: per-row hist moments (parallel over batch tiles) ----------
    row_sum, row_sumsq = pl.pallas_call(
        _stats_kernel,
        out_shape=(jax.ShapeDtypeStruct((B_pad, E), jnp.float32),
                   jax.ShapeDtypeStruct((B_pad, E), jnp.float32)),
        grid=(nb,),
        in_specs=[pl.BlockSpec((tile_b, T, E), lambda i: (i, 0, 0))],
        out_specs=[pl.BlockSpec((tile_b, E), lambda i: (i, 0)),
                   pl.BlockSpec((tile_b, E), lambda i: (i, 0))],
        compiler_params=pltpu.CompilerParams(
            dimension_semantics=("parallel",),
            vmem_limit_bytes=vmem_limit),
    )(hist_p)

    # ---- tiny (B,E)/(4E,) prep in plain JAX --------------------------------
    # Derive all four packed segments' BN stats from the per-row hist moments
    # and the item array, via per-row centered M2 + Chan combination.
    row_sum = row_sum[:B]
    row_sumsq = row_sumsq[:B]
    item_f = item_emb.astype(jnp.float32)                         # (B, E)
    T_f = jnp.float32(T)
    B_f = jnp.float32(B)

    hm = row_sum / T_f                                            # per-row mean
    hm2 = jnp.maximum(row_sumsq - row_sum * hm, 0.0)              # per-row sum (x-mean)^2

    def _combine(rmean, rm2):
        # Chan combination of B groups of equal count T -> biased (population)
        # mean/var over B*T elements, all additions non-negative / centered.
        g = jnp.mean(rmean, axis=0)
        m2 = jnp.sum(rm2, axis=0) + T_f * jnp.sum((rmean - g) ** 2, axis=0)
        return g, m2 / (B_f * T_f)

    # seg0: item broadcast over T -> stats over the B item rows.
    m0 = jnp.mean(item_f, axis=0)
    v0 = jnp.mean((item_f - m0) ** 2, axis=0)
    # seg1: hist.
    m1, v1 = _combine(hm, hm2)
    # seg2: item - hist  (per-row mean = item - hm, per-row M2 = hm2).
    m2_, v2 = _combine(item_f - hm, hm2)
    # seg3: item * hist  (per-row mean = item*hm, per-row M2 = item^2*hm2).
    m3, v3 = _combine(item_f * hm, (item_f * item_f) * hm2)

    mean = jnp.concatenate([m0, m1, m2_, m3])                     # (4E,)
    var = jnp.concatenate([v0, v1, v2, v3])                       # (4E,)

    inv_std = jax.lax.rsqrt(var + EPS)
    g = gamma.astype(jnp.float32)
    scale = g * inv_std
    shift = beta.astype(jnp.float32) - mean * scale
    params = jnp.stack([scale, shift, w.astype(jnp.float32)], axis=0)   # (3, 4E)
    scalars = jnp.concatenate([b.astype(jnp.float32).reshape(1),
                               alpha.astype(jnp.float32).reshape(1)])   # (2,)

    # ---- pass 2: apply (parallel over batch tiles / v7x dual TC) -----------
    out = pl.pallas_call(
        _apply_kernel,
        out_shape=jax.ShapeDtypeStruct((B_pad, E), jnp.float32),
        grid=(nb,),
        in_specs=[
            pl.BlockSpec((tile_b, E), lambda i: (i, 0)),
            pl.BlockSpec((tile_b, T, E), lambda i: (i, 0, 0)),
            pl.BlockSpec((3, F), lambda i: (0, 0)),                  # scale/shift/w
            pl.BlockSpec(memory_space=pltpu.MemorySpace.SMEM),       # [bias, alpha]
        ],
        out_specs=pl.BlockSpec((tile_b, E), lambda i: (i, 0)),
        compiler_params=pltpu.CompilerParams(
            dimension_semantics=("parallel",),
            vmem_limit_bytes=vmem_limit),
    )(item_p, hist_p, params, scalars)
    return out[:B]


# --------------------------------------------------------------------------- #
# Pure-JAX reference mirroring the PyTorch forward (flat 4E features).
# --------------------------------------------------------------------------- #
def ref_forward(item, hist, gamma, beta, w, b, alpha):
    B, T, E = hist.shape
    item_b = jnp.broadcast_to(item[:, None, :], (B, T, E))
    x = jnp.concatenate([item_b, hist, item_b - hist, item_b * hist],
                        axis=-1).reshape(B * T, 4 * E)
    mean = x.mean(axis=0)
    var = ((x - mean) ** 2).mean(axis=0)
    xn = (x - mean) / jnp.sqrt(var + EPS)
    px = jax.nn.sigmoid(xn * gamma + beta)
    h = alpha[0] * (1.0 - px) * x + px * x
    logits = (h @ w + b[0]).reshape(B, T)
    mask = jnp.sum((hist != 0.0).astype(jnp.float32), axis=-1)
    aw = logits * mask
    return jnp.sum(aw[:, :, None] * hist, axis=1)


if __name__ == "__main__":
    # B deliberately NOT a multiple of the tile -> exercises zero-padding,
    # multi-tile stats combination, and the parallel apply pass.
    B, T, E = 20, 8, 32   # batch, history length, embedding_dim (4E = 128 lanes)

    key = jax.random.PRNGKey(0)
    k_item, k_hist, k_w, k_b, k_g, k_be = jax.random.split(key, 6)

    item_emb = jax.random.normal(k_item, (B, E), dtype=jnp.float32)
    history_seq = jax.random.normal(k_hist, (B, T, E), dtype=jnp.float32)
    # zero out some history positions so the (!= 0) mask is exercised
    history_seq = history_seq.at[0, -1, :].set(0.0)
    history_seq = history_seq.at[3, 0, :].set(0.0)

    bound = 1.0 / jnp.sqrt(jnp.float32(4 * E))
    gamma = 1.0 + 0.1 * jax.random.normal(k_g, (4 * E,), dtype=jnp.float32)
    beta = 0.1 * jax.random.normal(k_be, (4 * E,), dtype=jnp.float32)
    w = jax.random.uniform(k_w, (4 * E,), dtype=jnp.float32,
                           minval=-bound, maxval=bound)
    b = jax.random.uniform(k_b, (1,), dtype=jnp.float32,
                           minval=-bound, maxval=bound)
    alpha = jnp.array([0.25], dtype=jnp.float32)

    # f32 path (tile_b=8 -> 3 batch tiles with padding 20 -> 24).
    out = din_attention(item_emb, history_seq, gamma, beta, w, b, alpha, tile_b=8)
    out = jax.block_until_ready(out)
    ref = ref_forward(item_emb, history_seq, gamma, beta, w, b, alpha)
    assert out.shape == (B, E)
    err = jnp.max(jnp.abs(out - ref))
    assert jnp.allclose(out, ref, rtol=1e-3, atol=1e-3), f"max abs diff = {err}"

    # bf16 storage path (halves HBM traffic on bandwidth-limited v5e/v6e);
    # compare against a reference fed the same bf16-rounded inputs.
    out_bf = din_attention(item_emb, history_seq, gamma, beta, w, b, alpha,
                           tile_b=8, storage_dtype=jnp.bfloat16)
    out_bf = jax.block_until_ready(out_bf)
    ref_bf = ref_forward(item_emb.astype(jnp.bfloat16).astype(jnp.float32),
                         history_seq.astype(jnp.bfloat16).astype(jnp.float32),
                         gamma, beta, w, b, alpha)
    err_bf = jnp.max(jnp.abs(out_bf - ref_bf))
    assert jnp.allclose(out_bf, ref_bf, rtol=1e-2, atol=1e-2), \
        f"bf16 max abs diff = {err_bf}"

    print("KERNEL_OK")
</pallas_src>

<mosaic_0001>
module attributes {stable_mosaic.version = 11 : i64} {
  func.func @_stats_kernel(%arg0: i32, %arg1: memref<8x8x32xf32, #tpu.memory_space<vmem>>, %arg2: memref<8x32xf32, #tpu.memory_space<vmem>>, %arg3: memref<8x32xf32, #tpu.memory_space<vmem>>) attributes {dimension_semantics = [#tpu.dimension_semantics<parallel>], iteration_bounds = array<i64: 3>, scalar_prefetch = 0 : i64, scratch_operands = 0 : i64, tpu.core_type = #tpu.core_type<tc>, window_params = [{transform_indices = @transform_0, window_bounds = array<i64: 8, 8, 32>}, {transform_indices = @transform_1, window_bounds = array<i64: 8, 32>}, {transform_indices = @transform_2, window_bounds = array<i64: 8, 32>}]} {
    %c0 = arith.constant 0 : index
    %c0_0 = arith.constant 0 : index
    %c0_1 = arith.constant 0 : index
    %0 = vector.load %arg1[%c0, %c0_0, %c0_1] : memref<8x8x32xf32, #tpu.memory_space<vmem>>, vector<8x8x32xf32>
    %cst = arith.constant dense<0.000000e+00> : vector<8x32xf32>
    %1 = vector.multi_reduction <add>, %0, %cst [1] : vector<8x8x32xf32> to vector<8x32xf32>
    %c0_2 = arith.constant 0 : index
    %c0_3 = arith.constant 0 : index
    %2 = vector.load %arg2[%c0_2, %c0_3] : memref<8x32xf32, #tpu.memory_space<vmem>>, vector<8x32xf32>
    tpu.vector_store %arg2[%c0_2, %c0_3], %1 {strides = array<i32>} : memref<8x32xf32, #tpu.memory_space<vmem>>, vector<8x32xf32>,
    %3 = arith.mulf %0, %0 : vector<8x8x32xf32>
    %cst_4 = arith.constant dense<0.000000e+00> : vector<8x32xf32>
    %4 = vector.multi_reduction <add>, %3, %cst_4 [1] : vector<8x8x32xf32> to vector<8x32xf32>
    %c0_5 = arith.constant 0 : index
    %c0_6 = arith.constant 0 : index
    %5 = vector.load %arg3[%c0_5, %c0_6] : memref<8x32xf32, #tpu.memory_space<vmem>>, vector<8x32xf32>
    tpu.vector_store %arg3[%c0_5, %c0_6], %4 {strides = array<i32>} : memref<8x32xf32, #tpu.memory_space<vmem>>, vector<8x32xf32>,
    return
  }
  func.func @transform_0(%arg0: i32) -> (i32, i32, i32) {
    %c0_i32 = arith.constant 0 : i32
    %c0_i32_0 = arith.constant 0 : i32
    %c0_i32_1 = arith.constant 0 : i32
    return %arg0, %c0_i32, %c0_i32_0 : i32, i32, i32
  }
  func.func @transform_1(%arg0: i32) -> (i32, i32) {
    %c0_i32 = arith.constant 0 : i32
    %c0_i32_0 = arith.constant 0 : i32
    return %arg0, %c0_i32 : i32, i32
  }
  func.func @transform_2(%arg0: i32) -> (i32, i32) {
    %c0_i32 = arith.constant 0 : i32
    %c0_i32_0 = arith.constant 0 : i32
    return %arg0, %c0_i32 : i32, i32
  }
}

</mosaic_0001>

<llo_original>
// kernel: tpu_custom_call.1
$region0: #{tpu_custom_call.1}
  #allocation0 [shape = 'u32[]', space=smem, size = 0x4, offset = 0x4, fixed_abs, tag = 'smem constant byte address 0x4 - core index']
  #allocation1 [shape = 'u32[144,128]{1,0:T(1,128)}', space=vmem, size = 0x12000, scoped, tag = 'internal scratch']
  %s0 = inlined_call_operand.hbm [shape: f32[24,8,32], index: 0, kind: input, shape index: {}]
  %s1 = inlined_call_operand.hbm [shape: f32[24,32], index: 1, kind: output, shape index: {0}]
  %s2 = inlined_call_operand.hbm [shape: f32[24,32], index: 2, kind: output, shape index: {1}]
  %3 = xla_tuple %s1, %s2
  %s4 = sld [smem:[#allocation0]]
  $region49: #{tpu_custom_call.1} parent=0
    _
  %s6 = ssub.s32 1, %s4
  %s7 = scalar_select 0, %s6, %s4
  $region1: #{tpu_custom_call.1} parent=0
    #allocation2 [shape = 'u8[65536]{0}', space=vmem, size = 0x10000, scoped, tag = 'input window, operand 0']
    #allocation3 [shape = 's32[2]{0}', space=sflag, size = 0x8, scoped, tag = 'scoped memory for tpu_custom_call.1']
    #allocation4 [shape = 's32[2]{0}', space=sflag, size = 0x8, scoped, tag = 'scoped memory for tpu_custom_call.1']
    #allocation5 [shape = 'u8[8192]{0}', space=vmem, size = 0x2000, scoped, tag = 'output window, operand 0']
    #allocation6 [shape = 'u8[8192]{0}', space=vmem, size = 0x2000, scoped, tag = 'output window, operand 1']
    #allocation7 [shape = 's32[2]{0}', space=sflag, size = 0x8, scoped, tag = 'scoped memory for tpu_custom_call.1']
    %8 = vsyncpa [#allocation3], 0
    %s9 = scalar_lea.sflag [#allocation3], 1
    %10 = vsyncpa %s9, 0
    %11 = vsyncpa [#allocation4], 0
    %s12 = scalar_lea.sflag [#allocation4], 1
    %13 = vsyncpa %s12, 0
    %14 = vsyncpa [#allocation7], 0
    %s15 = scalar_lea.sflag [#allocation7], 1
    %16 = vsyncpa %s15, 0
    loop: start=0, step=1, limit=5
    $region2: #{tpu_custom_call.1} parent=1 // loop_pre_header
      _
    $region3: #{tpu_custom_call.1} parent=1 // loop_header
      %s18 = sphi 0, %s22
      %p19 = scmp.ge.s32.totalorder %s18, 5
      %s28 = sphi 0, %s30
      %s31 = sphi 0, %s28
      %s32 = sphi 0, %s31
      %s48 = sphi 0, %s32
      %s54 = sphi 0, %s56
      %s57 = sphi 0, %s54
      %s58 = sphi 0, %s57
      %s74 = sphi 0, %s58
      %s80 = sphi 0, %s82
      %s83 = sphi 0, %s80
      %s84 = sphi 0, %s83
      %s100 = sphi 0, %s84
    $region4: #{tpu_custom_call.1} parent=1 // loop_header_branch
      %21 = sbr.rel (%p19) target = $region8
    $region5: #{tpu_custom_call.1} parent=1 // loop_body
      %s23 = ssub.s32 %s18, 1
      %s24 = ssub.s32 %s18, 2
      %s25 = sadd.s32 %s18, 1
      %s26 = ssub.s32 %s18, %s25
      %p27 = scmp.eq.s32.totalorder %s26, 0
      %s29 = sadd.s32 %s28, 1
      %s30 = scalar_select %p27, %s28, %s29
      %p33 = pneg %p27
      %p34 = scmp.eq.s32.totalorder %s18, 2
      %p35 = por %p33, %p34
      %p36 = scmp.ne.s32.totalorder %s28, %s31
      %p37 = scmp.eq.s32.totalorder %s18, 0
      %p38 = por %p36, %p37
      %p39 = scmp.ne.s32.totalorder %s28, %s31
      %p40 = scmp.eq.s32.totalorder %s23, 2
      %p41 = por %p39, %p40
      %p42 = scmp.ne.s32.totalorder %s31, %s32
      %p43 = scmp.eq.s32.totalorder %s23, 0
      %p44 = por %p42, %p43
      %p45 = scmp.ne.s32.totalorder %s31, %s32
      %p46 = scmp.eq.s32.totalorder %s24, 2
      %p47 = por %p45, %p46
      %p49 = scmp.ne.s32.totalorder %s32, %s48
      %p50 = scmp.eq.s32.totalorder %s24, 0
      %p51 = por %p49, %p50
      %s52 = ssub.s32 %s18, %s25
      %p53 = scmp.eq.s32.totalorder %s52, 0
      %s55 = sadd.s32 %s54, 1
      %s56 = scalar_select %p53, %s54, %s55
      %p59 = pneg %p53
      %p60 = scmp.eq.s32.totalorder %s18, 2
      %p61 = por %p59, %p60
      %p62 = scmp.ne.s32.totalorder %s54, %s57
      %p63 = scmp.eq.s32.totalorder %s18, 0
      %p64 = por %p62, %p63
      %p65 = scmp.ne.s32.totalorder %s54, %s57
      %p66 = scmp.eq.s32.totalorder %s23, 2
      %p67 = por %p65, %p66
      %p68 = scmp.ne.s32.totalorder %s57, %s58
      %p69 = scmp.eq.s32.totalorder %s23, 0
      %p70 = por %p68, %p69
      %p71 = scmp.ne.s32.totalorder %s57, %s58
      %p72 = scmp.eq.s32.totalorder %s24, 2
      %p73 = por %p71, %p72
      %p75 = scmp.ne.s32.totalorder %s58, %s74
      %p76 = scmp.eq.s32.totalorder %s24, 0
      %p77 = por %p75, %p76
      %s78 = ssub.s32 %s18, %s25
      %p79 = scmp.eq.s32.totalorder %s78, 0
      %s81 = sadd.s32 %s80, 1
      %s82 = scalar_select %p79, %s80, %s81
      %p85 = pneg %p79
      %p86 = scmp.eq.s32.totalorder %s18, 2
      %p87 = por %p85, %p86
      %p88 = scmp.ne.s32.totalorder %s80, %s83
      %p89 = scmp.eq.s32.totalorder %s18, 0
      %p90 = por %p88, %p89
      %p91 = scmp.ne.s32.totalorder %s80, %s83
      %p92 = scmp.eq.s32.totalorder %s23, 2
      %p93 = por %p91, %p92
      %p94 = scmp.ne.s32.totalorder %s83, %s84
      %p95 = scmp.eq.s32.totalorder %s23, 0
      %p96 = por %p94, %p95
      %p97 = scmp.ne.s32.totalorder %s83, %s84
      %p98 = scmp.eq.s32.totalorder %s24, 2
      %p99 = por %p97, %p98
      %p101 = scmp.ne.s32.totalorder %s84, %s100
      %p102 = scmp.eq.s32.totalorder %s24, 0
      %p103 = por %p101, %p102
      %p104 = scmp.le.s32.totalorder 1, %s18
      %p105 = scmp.lt.s32.totalorder %s18, 4
      %p106 = pnand %p104, %p105
      %p107 = pneg %p106
      // Predicated region
      $region9: #{tpu_custom_call.1} parent=5 // pred_check
        _
      $region10: #{tpu_custom_call.1} parent=5 // pred_check_branch
        %109 = sbr.rel (%p106) target = $region12
      $region11: #{tpu_custom_call.1} parent=5 // pred_region
        %s110 = ssub.s32 %s18, 1
      $region12: #{tpu_custom_call.1} parent=5 // pred_fallthru
        _
      %p111 = scmp.lt.s32.totalorder %s18, 3
      // Predicated region
      $region13: #{tpu_custom_call.1} parent=5 // pred_check
        %p112 = pneg %p111
      $region14: #{tpu_custom_call.1} parent=5 // pred_check_branch
        %114 = sbr.rel (%p112) target = $region16
      $region15: #{tpu_custom_call.1} parent=5 // pred_region
        // Predicated region
        $region17: #{tpu_custom_call.1} parent=15 // pred_check
          %p115 = pneg %p38
        $region18: #{tpu_custom_call.1} parent=15 // pred_check_branch
          %117 = sbr.rel (%p115) target = $region20
        $region19: #{tpu_custom_call.1} parent=15 // pred_region
          %s118 = sand.u32 %s28, 1
          %s119 = scalar_lea.sflag [#allocation3], %s118
          %s120 = sand.u32 %s28, 1
          %s121 = smul.addr %s120, 64
          %s122 = scalar_lea.vmem [#allocation2], %s121
          %s123 = smul.u32 8, %s18
          %s125 = ssub.s32 1024, 1024
          %126 = vsyncadd %s119, %s125
          %s127 = smul.addr %s123, 128
          %s128 = scalar_lea.hbm %s0, %s127
          %s129 = sshll.u32 %s122, 4
          %s130 = int_to_ptr.vmem [resolvable:$true] %s129
          %135 = dma.hbm_to_vmem [thread:$0]  %s128, 1024, %s130, %s119, 128, 128, 8
        $region20: #{tpu_custom_call.1} parent=15 // pred_fallthru
          _
      $region16: #{tpu_custom_call.1} parent=5 // pred_fallthru
        _
      %p136 = scmp.le.s32.totalorder 1, %s18
      %p137 = scmp.lt.s32.totalorder %s18, 4
      %p138 = pnand %p136, %p137
      %p139 = pneg %p138
      // Predicated region
      $region21: #{tpu_custom_call.1} parent=5 // pred_check
        _
      $region22: #{tpu_custom_call.1} parent=5 // pred_check_branch
        %141 = sbr.rel (%p138) target = $region24
      $region23: #{tpu_custom_call.1} parent=5 // pred_region
        %s142 = ssub.s32 %s18, 1
        %s143 = sand.u32 %s31, 1
        %s144 = scalar_lea.sflag [#allocation3], %s143
        %s145 = sand.u32 %s31, 1
        %s146 = smul.addr %s145, 64
        %s147 = scalar_lea.vmem [#allocation2], %s146
        // Predicated region
        $region25: #{tpu_custom_call.1} parent=23 // pred_check
          %p148 = pneg %p44
        $region26: #{tpu_custom_call.1} parent=23 // pred_check_branch
          %150 = sbr.rel (%p148) target = $region28
        $region27: #{tpu_custom_call.1} parent=23 // pred_region
          %151 = dma.done %s144, 1024
        $region28: #{tpu_custom_call.1} parent=23 // pred_fallthru
          _
        %s152 = sand.u32 %s31, 1
        %s153 = scalar_lea.sflag [#allocation3], %s152
        %s154 = sand.u32 %s31, 1
        %s155 = smul.addr %s154, 64
        %s156 = scalar_lea.vmem [#allocation2], %s155
        %p157 = pneg %p44
        %p158 = pneg %p41
        %p159 = pneg %p70
        %p160 = pneg %p67
        %s161 = sand.u32 %s57, 1
        %s162 = scalar_lea.sflag [#allocation4], %s161
        %s163 = sand.u32 %s57, 1
        %s164 = smul.addr %s163, 8
        %s165 = scalar_lea.vmem [#allocation5], %s164
        %p166 = pneg %p96
        %p167 = pneg %p93
        %s168 = sand.u32 %s83, 1
        %s169 = scalar_lea.sflag [#allocation7], %s168
        %s170 = sand.u32 %s83, 1
        %s171 = smul.addr %s170, 8
        %s172 = scalar_lea.vmem [#allocation6], %s171
        %s173 = smul.u32 8, %s23
        %v174 = vld [vmem:[%s147] sm:$0xff]
        %v175 = vld [vmem:[%s147 + $0x8] sm:$0xff]
        %v176 = vld [vmem:[%s147 + $0x10] sm:$0xff]
        %v177 = vld [vmem:[%s147 + $0x18] sm:$0xff]
        %v178 = vld [vmem:[%s147 + $0x20] sm:$0xff]
        %v179 = vld [vmem:[%s147 + $0x28] sm:$0xff]
        %v180 = vld [vmem:[%s147 + $0x30] sm:$0xff]
        %v181 = vld [vmem:[%s147 + $0x38] sm:$0xff]
        %vm182 = vcmask 261120
        %v183 = vsel %vm182, %v174, 0.0
        %v184 = vrot.slane %v183, 4
        %v185 = vadd.f32 %v183, %v184
        %v186 = vrot.slane %v185, 2
        %v187 = vadd.f32 %v185, %v186
        %v188 = vrot.slane %v187, 1
        %v189 = vadd.f32 %v187, %v188
        %v190 = vsel %vm182, %v175, 0.0
        %v191 = vrot.slane %v190, 4
        %v192 = vadd.f32 %v190, %v191
        %v193 = vrot.slane %v192, 2
        %v194 = vadd.f32 %v192, %v193
        %v195 = vrot.slane %v194, 1
        %v196 = vadd.f32 %v194, %v195
        %v197 = vsel %vm182, %v176, 0.0
        %v198 = vrot.slane %v197, 4
        %v199 = vadd.f32 %v197, %v198
        %v200 = vrot.slane %v199, 2
        %v201 = vadd.f32 %v199, %v200
        %v202 = vrot.slane %v201, 1
        %v203 = vadd.f32 %v201, %v202
        %v204 = vsel %vm182, %v177, 0.0
        %v205 = vrot.slane %v204, 4
        %v206 = vadd.f32 %v204, %v205
        %v207 = vrot.slane %v206, 2
        %v208 = vadd.f32 %v206, %v207
        %v209 = vrot.slane %v208, 1
        %v210 = vadd.f32 %v208, %v209
        %v211 = vsel %vm182, %v178, 0.0
        %v212 = vrot.slane %v211, 4
        %v213 = vadd.f32 %v211, %v212
        %v214 = vrot.slane %v213, 2
        %v215 = vadd.f32 %v213, %v214
        %v216 = vrot.slane %v215, 1
        %v217 = vadd.f32 %v215, %v216
        %v218 = vsel %vm182, %v179, 0.0
        %v219 = vrot.slane %v218, 4
        %v220 = vadd.f32 %v218, %v219
        %v221 = vrot.slane %v220, 2
        %v222 = vadd.f32 %v220, %v221
        %v223 = vrot.slane %v222, 1
        %v224 = vadd.f32 %v222, %v223
        %v225 = vsel %vm182, %v180, 0.0
        %v226 = vrot.slane %v225, 4
        %v227 = vadd.f32 %v225, %v226
        %v228 = vrot.slane %v227, 2
        %v229 = vadd.f32 %v227, %v228
        %v230 = vrot.slane %v229, 1
        %v231 = vadd.f32 %v229, %v230
        %v232 = vsel %vm182, %v181, 0.0
        %v233 = vrot.slane %v232, 4
        %v234 = vadd.f32 %v232, %v233
        %v235 = vrot.slane %v234, 2
        %v236 = vadd.f32 %v234, %v235
        %v237 = vrot.slane %v236, 1
        %v238 = vadd.f32 %v236, %v237
        %vm247 = vcmask 1041409
        %v248 = vsel %vm247, %v196, %v189
        %vm249 = vcmask 1042434
        %v250 = vsel %vm249, %v203, %v248
        %vm251 = vcmask 1043459
        %v252 = vsel %vm251, %v210, %v250
        %vm253 = vcmask 1044484
        %v254 = vsel %vm253, %v217, %v252
        %vm255 = vcmask 1045509
        %v256 = vsel %vm255, %v224, %v254
        %vm257 = vcmask 1046534
        %v258 = vsel %vm257, %v231, %v256
        %vm259 = vcmask 1047559
        %v260 = vsel %vm259, %v238, %v258
        %262 = vst.msk [vmem:[%s165] sm:$0xff] %vm182, %v260
        %v263 = vmul.f32 %v174, %v174
        %v264 = vmul.f32 %v175, %v175
        %v265 = vmul.f32 %v176, %v176
        %v266 = vmul.f32 %v177, %v177
        %v267 = vmul.f32 %v178, %v178
        %v268 = vmul.f32 %v179, %v179
        %v269 = vmul.f32 %v180, %v180
        %v270 = vmul.f32 %v181, %v181
        %v271 = vsel %vm182, %v263, 0.0
        %v272 = vrot.slane %v271, 4
        %v273 = vadd.f32 %v271, %v272
        %v274 = vrot.slane %v273, 2
        %v275 = vadd.f32 %v273, %v274
        %v276 = vrot.slane %v275, 1
        %v277 = vadd.f32 %v275, %v276
        %v278 = vsel %vm182, %v264, 0.0
        %v279 = vrot.slane %v278, 4
        %v280 = vadd.f32 %v278, %v279
        %v281 = vrot.slane %v280, 2
        %v282 = vadd.f32 %v280, %v281
        %v283 = vrot.slane %v282, 1
        %v284 = vadd.f32 %v282, %v283
        %v285 = vsel %vm182, %v265, 0.0
        %v286 = vrot.slane %v285, 4
        %v287 = vadd.f32 %v285, %v286
        %v288 = vrot.slane %v287, 2
        %v289 = vadd.f32 %v287, %v288
        %v290 = vrot.slane %v289, 1
        %v291 = vadd.f32 %v289, %v290
        %v292 = vsel %vm182, %v266, 0.0
        %v293 = vrot.slane %v292, 4
        %v294 = vadd.f32 %v292, %v293
        %v295 = vrot.slane %v294, 2
        %v296 = vadd.f32 %v294, %v295
        %v297 = vrot.slane %v296, 1
        %v298 = vadd.f32 %v296, %v297
        %v299 = vsel %vm182, %v267, 0.0
        %v300 = vrot.slane %v299, 4
        %v301 = vadd.f32 %v299, %v300
        %v302 = vrot.slane %v301, 2
        %v303 = vadd.f32 %v301, %v302
        %v304 = vrot.slane %v303, 1
        %v305 = vadd.f32 %v303, %v304
        %v306 = vsel %vm182, %v268, 0.0
        %v307 = vrot.slane %v306, 4
        %v308 = vadd.f32 %v306, %v307
        %v309 = vrot.slane %v308, 2
        %v310 = vadd.f32 %v308, %v309
        %v311 = vrot.slane %v310, 1
        %v312 = vadd.f32 %v310, %v311
        %v313 = vsel %vm182, %v269, 0.0
        %v314 = vrot.slane %v313, 4
        %v315 = vadd.f32 %v313, %v314
        %v316 = vrot.slane %v315, 2
        %v317 = vadd.f32 %v315, %v316
        %v318 = vrot.slane %v317, 1
        %v319 = vadd.f32 %v317, %v318
        %v320 = vsel %vm182, %v270, 0.0
        %v321 = vrot.slane %v320, 4
        %v322 = vadd.f32 %v320, %v321
        %v323 = vrot.slane %v322, 2
        %v324 = vadd.f32 %v322, %v323
        %v325 = vrot.slane %v324, 1
        %v326 = vadd.f32 %v324, %v325
        %v335 = vsel %vm247, %v284, %v277
        %v336 = vsel %vm249, %v291, %v335
        %v337 = vsel %vm251, %v298, %v336
        %v338 = vsel %vm253, %v305, %v337
        %v339 = vsel %vm255, %v312, %v338
        %v340 = vsel %vm257, %v319, %v339
        %v341 = vsel %vm259, %v326, %v340
        %343 = vst.msk [vmem:[%s172] sm:$0xff] %vm182, %v341
        %s344 = sand.u32 %s57, 1
        %s345 = scalar_lea.sflag [#allocation4], %s344
        %s346 = sand.u32 %s57, 1
        %s347 = smul.addr %s346, 8
        %s348 = scalar_lea.vmem [#allocation5], %s347
        %s349 = sand.u32 %s83, 1
        %s350 = scalar_lea.sflag [#allocation7], %s349
        %s351 = sand.u32 %s83, 1
        %s352 = smul.addr %s351, 8
        %s353 = scalar_lea.vmem [#allocation6], %s352
        // Predicated region
        $region29: #{tpu_custom_call.1} parent=23 // pred_check
          %p354 = pneg %p67
        $region30: #{tpu_custom_call.1} parent=23 // pred_check_branch
          %356 = sbr.rel (%p354) target = $region32
        $region31: #{tpu_custom_call.1} parent=23 // pred_region
          %s358 = ssub.s32 128, 128
          %359 = vsyncadd %s345, %s358
          %s360 = smul.addr %s23, 128
          %s361 = scalar_lea.hbm %s1, %s360
          %s363 = sshll.u32 %s348, 4
          %s364 = int_to_ptr.vmem [resolvable:$true] %s363
          %366 = dma.vmem_to_hbm [thread:$0]  %s364, 128, %s361, %s345
        $region32: #{tpu_custom_call.1} parent=23 // pred_fallthru
          _
        // Predicated region
        $region33: #{tpu_custom_call.1} parent=23 // pred_check
          %p367 = pneg %p93
        $region34: #{tpu_custom_call.1} parent=23 // pred_check_branch
          %369 = sbr.rel (%p367) target = $region36
        $region35: #{tpu_custom_call.1} parent=23 // pred_region
          %s371 = ssub.s32 128, 128
          %372 = vsyncadd %s350, %s371
          %s373 = smul.addr %s23, 128
          %s374 = scalar_lea.hbm %s2, %s373
          %s376 = sshll.u32 %s353, 4
          %s377 = int_to_ptr.vmem [resolvable:$true] %s376
          %379 = dma.vmem_to_hbm [thread:$0]  %s377, 128, %s374, %s350
        $region36: #{tpu_custom_call.1} parent=23 // pred_fallthru
          _
      $region24: #{tpu_custom_call.1} parent=5 // pred_fallthru
        _
      %p380 = scmp.le.s32.totalorder 2, %s18
      // Predicated region
      $region37: #{tpu_custom_call.1} parent=5 // pred_check
        %p381 = pneg %p380
      $region38: #{tpu_custom_call.1} parent=5 // pred_check_branch
        %383 = sbr.rel (%p381) target = $region40
      $region39: #{tpu_custom_call.1} parent=5 // pred_region
        %s384 = ssub.s32 %s18, 2
        // Predicated region
        $region41: #{tpu_custom_call.1} parent=39 // pred_check
          %p385 = pneg %p73
        $region42: #{tpu_custom_call.1} parent=39 // pred_check_branch
          %387 = sbr.rel (%p385) target = $region44
        $region43: #{tpu_custom_call.1} parent=39 // pred_region
          %s388 = sand.u32 %s58, 1
          %s389 = scalar_lea.sflag [#allocation4], %s388
          %s390 = sand.u32 %s58, 1
          %s391 = smul.addr %s390, 8
          %s392 = scalar_lea.vmem [#allocation5], %s391
          %393 = dma.done %s389, 128
        $region44: #{tpu_custom_call.1} parent=39 // pred_fallthru
          _
        // Predicated region
        $region45: #{tpu_custom_call.1} parent=39 // pred_check
          %p394 = pneg %p99
        $region46: #{tpu_custom_call.1} parent=39 // pred_check_branch
          %396 = sbr.rel (%p394) target = $region48
        $region47: #{tpu_custom_call.1} parent=39 // pred_region
          %s397 = sand.u32 %s84, 1
          %s398 = scalar_lea.sflag [#allocation7], %s397
          %s399 = sand.u32 %s84, 1
          %s400 = smul.addr %s399, 8
          %s401 = scalar_lea.vmem [#allocation6], %s400
          %402 = dma.done %s398, 128
        $region48: #{tpu_custom_call.1} parent=39 // pred_fallthru
          _
      $region40: #{tpu_custom_call.1} parent=5 // pred_fallthru
        _
    $region6: #{tpu_custom_call.1} parent=1 // loop_footer
      %s22 = sadd.s32 1, %s18
    $region7: #{tpu_custom_call.1} parent=1 // loop_footer_branch
      %17 = sbr.rel target = $region3
    $region8: #{tpu_custom_call.1} parent=1 // loop_exit
      _
    %403 = vsyncpa [#allocation3], 1
    %s404 = scalar_lea.sflag [#allocation3], 1
    %405 = vsyncpa %s404, 1
    %406 = vsyncpa [#allocation4], 1
    %s407 = scalar_lea.sflag [#allocation4], 1
    %408 = vsyncpa %s407, 1
    %409 = vsyncpa [#allocation7], 1
    %s410 = scalar_lea.sflag [#allocation7], 1
    %411 = vsyncpa %s410, 1

</llo_original>
